<compile_context>
chip_gen: v6e
topology: v6e:2x2x1
jax: 0.10.0
libtpu: 0.0.40
codegen_flags: <defaults>
</compile_context>

<pallas_src>
import functools

import jax
import jax.numpy as jnp
from jax.experimental import pallas as pl
from jax.experimental.pallas import tpu as pltpu


def _layernorm_f32(x, gamma, beta, eps):
    x = x.astype(jnp.float32)
    mean = jnp.mean(x, axis=-1, keepdims=True)
    xc = x - mean
    var = jnp.mean(xc * xc, axis=-1, keepdims=True)
    inv = jax.lax.rsqrt(var + eps)
    return xc * inv * gamma.astype(jnp.float32) + beta.astype(jnp.float32)


def _bias_gelu(h_f32, b1_ref, approximate, elem_dtype):
    if approximate:
        # tanh-approximate GELU: transcendental goes to the EUP (separate VLIW slot).
        h = h_f32.astype(elem_dtype) + b1_ref[...].astype(elem_dtype)
        return jax.nn.gelu(h, approximate=True)
    # Exact erf GELU (bit-parity with torch.nn.GELU default), kept in f32.
    h = h_f32 + b1_ref[...].astype(jnp.float32)
    return 0.5 * h * (1.0 + jax.lax.erf(h * 0.7071067811865476))


def _mlp_fused_kernel(x_ref, gamma_ref, beta_ref, w1_ref, b1_ref, w2_ref, b2_ref,
                      o_ref, *, eps, approximate, elem_dtype):
    """Weight-resident path: full H in one step, no scratch, 1-D grid over M tiles."""
    xn = _layernorm_f32(x_ref[...], gamma_ref[...], beta_ref[...], eps)
    xn = xn.astype(w1_ref.dtype)
    h = jnp.dot(xn, w1_ref[...], preferred_element_type=jnp.float32)
    h = _bias_gelu(h, b1_ref, approximate, elem_dtype)
    # Dropout (p=0.1) is identity in eval mode.
    y = jnp.dot(h.astype(w2_ref.dtype), w2_ref[...], preferred_element_type=jnp.float32)
    y = y + b2_ref[...].astype(jnp.float32)
    # Final dropout is identity in eval mode.
    o_ref[...] = y.astype(o_ref.dtype)


def _mlp_streamed_kernel(x_ref, gamma_ref, beta_ref, w1_ref, b1_ref, w2_ref, b2_ref,
                         o_ref, xn_ref, acc_ref, *, eps, approximate, elem_dtype):
    """Streamed path: H split across grid axis 1 with an f32 VMEM accumulator."""
    j = pl.program_id(1)
    nj = pl.num_programs(1)

    # LayerNorm once per M-tile; cached in VMEM in the matmul dtype.
    @pl.when(j == 0)
    def _():
        xn = _layernorm_f32(x_ref[...], gamma_ref[...], beta_ref[...], eps)
        xn_ref[...] = xn.astype(xn_ref.dtype)
        acc_ref[...] = jnp.zeros_like(acc_ref)

    h = jnp.dot(xn_ref[...], w1_ref[...], preferred_element_type=jnp.float32)
    h = _bias_gelu(h, b1_ref, approximate, elem_dtype)
    # Dropout (p=0.1) is identity in eval mode.
    acc_ref[...] += jnp.dot(h.astype(w2_ref.dtype), w2_ref[...],
                            preferred_element_type=jnp.float32)

    @pl.when(j == nj - 1)
    def _():
        y = acc_ref[...] + b2_ref[...].astype(jnp.float32)
        # Final dropout is identity in eval mode.
        o_ref[...] = y.astype(o_ref.dtype)


def mlp_block(x, gamma, beta, w1, b1, w2, b2, *, eps=1e-5, approximate_gelu=True,
              tile_m=512, tile_h=None, matmul_dtype=None):
    """x: (B, S, E).  Returns (B, S, E).  w1: (E, H), w2: (H, E)."""
    B, S, E = x.shape
    E_w, H = w1.shape
    assert E_w == E and w2.shape == (H, E)
    M = B * S

    x_dtype = jnp.dtype(x.dtype)
    w_dtype = jnp.dtype(matmul_dtype) if matmul_dtype is not None else jnp.dtype(w1.dtype)
    bf16 = jnp.dtype(jnp.bfloat16)
    elem_dtype = jnp.bfloat16 if w_dtype == bf16 else jnp.float32
    itx = x_dtype.itemsize
    itw = w_dtype.itemsize

    # ---- generation-aware VMEM budget (128 MiB v5e/v6e, 64 MiB/TC v7x) ----
    try:
        vmem_cap = int(pltpu.get_tpu_info().vmem_capacity_bytes)
    except Exception:
        vmem_cap = 64 * 1024 * 1024   # conservative fallback (v7x-sized)
    budget = int(0.70 * vmem_cap)     # what we plan tiles against
    hard_cap = int(0.75 * vmem_cap)   # max scoped VMEM we will ever request

    m_align = 16 if x_dtype == bf16 else 8

    def align_m(t):
        return max(m_align, pl.cdiv(int(t), m_align) * m_align)

    # Cap tile_m so the "parallel" M axis has >= 2 steps (both v7x TCs get work).
    tm_req = align_m(min(int(tile_m), max(pl.cdiv(M, 2), m_align)))

    def est_fused(tm):
        return (4 * tm * E * itx                        # x + out tiles (double buffered)
                + 2 * E * H * itw + 2 * H * E * itw     # resident w1 + w2 (2 buffers each)
                + tm * E * 4                            # f32 LayerNorm intermediate
                + tm * H * 4 + tm * H * itw             # f32 hidden + cast copy
                + 8 * (E + H) * itw)                    # gamma/beta/b1/b2

    def est_streamed(tm, th):
        return (4 * tm * E * itx
                + tm * E * itw + tm * E * 4             # xn scratch + f32 accumulator
                + 2 * E * th * itw + 2 * th * E * itw   # streamed weight slabs (2 buffers)
                + tm * E * 4
                + tm * th * 4 + tm * th * itw
                + 8 * (E + th) * itw)

    # Candidate tile_m values (descending halvings, aligned).
    tm_candidates = []
    t = tm_req
    while t >= m_align:
        tm_candidates.append(t)
        t = (t // 2 // m_align) * m_align
    if tm_candidates[-1] != m_align:
        tm_candidates.append(m_align)

    def h_candidates():
        cands = set()
        for d in (2, 3, 4, 6, 8, 12, 16, 24, 32):
            c = H // d
            if c >= 128 and c % 128 == 0:
                cands.add(c)
        for c in (4096, 3072, 2048, 1536, 1024, 768, 512, 384, 256, 128):
            if c < H:
                cands.add(c)
        return sorted(cands, reverse=True)

    # ---- choose (tile_m, tile_h, fused) ----
    tm = tm_candidates[-1]
    if tile_h is not None:
        th_sel = int(tile_h)
        if th_sel >= H or H <= 128:
            fused, th_sel = True, H
        else:
            fused = False
            th_sel = min(H, max(128, pl.cdiv(th_sel, 128) * 128))
        for cand in tm_candidates:
            est = est_fused(cand) if fused else est_streamed(cand, th_sel)
            if est <= budget:
                tm = cand
                break
    else:
        fused, th_sel, done = False, min(H, 128), False
        # Phase 1: weight-resident (tile_h = H) at the largest tile_m that fits.
        for cand in tm_candidates:
            if est_fused(cand) <= budget:
                fused, tm, th_sel, done = True, cand, H, True
                break
        # Phase 2: stream the hidden dim with the largest slab that fits.
        if not done:
            for cand in tm_candidates:
                for c in h_candidates():
                    if est_streamed(cand, c) <= budget:
                        tm, th_sel, done = cand, c, True
                        break
                if done:
                    break
        if not done:   # pathological fallback
            tm, th_sel, fused = m_align, min(H, 128), (H <= 128)
            if fused:
                th_sel = H

    # Prefer a tile_m that divides M exactly (avoids padding the activation in HBM).
    if M % tm != 0:
        for cand in range(tm, max(m_align, tm // 2) - 1, -m_align):
            if M % cand == 0:
                tm = cand
                break
    M_pad = pl.cdiv(M, tm) * tm
    H_pad = H if fused else pl.cdiv(H, th_sel) * th_sel

    # ---- pad / cast operands ----
    x2d = x.reshape(M, E)
    if M_pad != M:
        x2d = jnp.pad(x2d, ((0, M_pad - M), (0, 0)))   # garbage-free zero rows; sliced off later
    w1p, b1p, w2p = w1, b1, w2
    if matmul_dtype is not None:
        w1p = w1p.astype(w_dtype)
        w2p = w2p.astype(w_dtype)
    if H_pad != H:
        w1p = jnp.pad(w1p, ((0, 0), (0, H_pad - H)))
        b1p = jnp.pad(b1p, ((0, H_pad - H),))
        w2p = jnp.pad(w2p, ((0, H_pad - H), (0, 0)))

    gamma2d = gamma.reshape(1, E)
    beta2d = beta.reshape(1, E)
    b1_2d = b1p.reshape(1, H_pad)
    b2_2d = b2.reshape(1, E)

    est = est_fused(tm) if fused else est_streamed(tm, th_sel)
    vmem_limit = int(min(hard_cap, max(32 * 1024 * 1024, int(1.2 * est) + (4 << 20))))

    if fused:
        kernel = functools.partial(_mlp_fused_kernel, eps=eps,
                                   approximate=approximate_gelu, elem_dtype=elem_dtype)
        out2d = pl.pallas_call(
            kernel,
            out_shape=jax.ShapeDtypeStruct((M_pad, E), x.dtype),
            grid_spec=pltpu.PrefetchScalarGridSpec(
                num_scalar_prefetch=0,
                grid=(M_pad // tm,),
                in_specs=[
                    pl.BlockSpec((tm, E), lambda i: (i, 0)),        # x tile
                    pl.BlockSpec((1, E), lambda i: (0, 0)),         # gamma
                    pl.BlockSpec((1, E), lambda i: (0, 0)),         # beta
                    pl.BlockSpec((E, H_pad), lambda i: (0, 0)),     # w1 (VMEM resident)
                    pl.BlockSpec((1, H_pad), lambda i: (0, 0)),     # b1
                    pl.BlockSpec((H_pad, E), lambda i: (0, 0)),     # w2 (VMEM resident)
                    pl.BlockSpec((1, E), lambda i: (0, 0)),         # b2
                ],
                out_specs=pl.BlockSpec((tm, E), lambda i: (i, 0)),
            ),
            compiler_params=pltpu.CompilerParams(
                dimension_semantics=("parallel",),
                vmem_limit_bytes=vmem_limit,
            ),
        )(x2d, gamma2d, beta2d, w1p, b1_2d, w2p, b2_2d)
    else:
        kernel = functools.partial(_mlp_streamed_kernel, eps=eps,
                                   approximate=approximate_gelu, elem_dtype=elem_dtype)
        out2d = pl.pallas_call(
            kernel,
            out_shape=jax.ShapeDtypeStruct((M_pad, E), x.dtype),
            grid_spec=pltpu.PrefetchScalarGridSpec(
                num_scalar_prefetch=0,
                grid=(M_pad // tm, H_pad // th_sel),
                in_specs=[
                    pl.BlockSpec((tm, E), lambda i, j: (i, 0)),       # x tile
                    pl.BlockSpec((1, E), lambda i, j: (0, 0)),        # gamma
                    pl.BlockSpec((1, E), lambda i, j: (0, 0)),        # beta
                    pl.BlockSpec((E, th_sel), lambda i, j: (0, j)),   # w1 slab
                    pl.BlockSpec((1, th_sel), lambda i, j: (0, j)),   # b1 slab
                    pl.BlockSpec((th_sel, E), lambda i, j: (j, 0)),   # w2 slab
                    pl.BlockSpec((1, E), lambda i, j: (0, 0)),        # b2
                ],
                out_specs=pl.BlockSpec((tm, E), lambda i, j: (i, 0)),
                scratch_shapes=[
                    pltpu.VMEM((tm, E), w_dtype),      # cached LayerNorm output
                    pltpu.VMEM((tm, E), jnp.float32),  # f32 accumulator
                ],
            ),
            compiler_params=pltpu.CompilerParams(
                dimension_semantics=("parallel", "arbitrary"),
                vmem_limit_bytes=vmem_limit,
            ),
        )(x2d, gamma2d, beta2d, w1p, b1_2d, w2p, b2_2d)

    if M_pad != M:
        out2d = out2d[:M]
    return out2d.reshape(B, S, E)


# TODO(synk): training-mode dropout (p=0.1) is not implemented; eval-mode identity is used.


if __name__ == "__main__":
    key = jax.random.PRNGKey(0)

    def make_inputs(k, B, S, E, H, dtype=jnp.float32):
        kx, k1, k2, k3, k4 = jax.random.split(k, 5)
        x = jax.random.normal(kx, (B, S, E), dtype)
        gamma = jnp.ones((E,), dtype)
        beta = jnp.zeros((E,), dtype)
        lim1 = 1.0 / float(E) ** 0.5
        w1 = jax.random.uniform(k1, (E, H), dtype, -lim1, lim1)
        b1 = jax.random.uniform(k2, (H,), dtype, -lim1, lim1)
        lim2 = 1.0 / float(H) ** 0.5
        w2 = jax.random.uniform(k3, (H, E), dtype, -lim2, lim2)
        b2 = jax.random.uniform(k4, (E,), dtype, -lim2, lim2)
        return x, gamma, beta, w1, b1, w2, b2

    def reference(x, gamma, beta, w1, b1, w2, b2, approximate, eps=1e-5):
        mean = jnp.mean(x, -1, keepdims=True)
        var = jnp.mean((x - mean) ** 2, -1, keepdims=True)
        xn = (x - mean) * jax.lax.rsqrt(var + eps) * gamma + beta
        h = xn @ w1 + b1
        if approximate:
            h = jax.nn.gelu(h, approximate=True)
        else:
            h = 0.5 * h * (1.0 + jax.lax.erf(h * 0.7071067811865476))
        return h @ w2 + b2

    k1, k2 = jax.random.split(key)

    # 1) fused (weight-resident) path, tanh-approximate GELU (default).
    args = make_inputs(k1, 2, 8, 32, 64)
    out = jax.block_until_ready(mlp_block(*args))
    ref = reference(*args, approximate=True)
    assert out.shape == (2, 8, 32)
    assert jnp.allclose(out, ref, atol=1e-3, rtol=1e-3), "fused/approx-GELU mismatch"

    # 2) exact-erf GELU (parity with torch.nn.GELU default).
    out = jax.block_until_ready(mlp_block(*args, approximate_gelu=False))
    ref = reference(*args, approximate=False)
    assert jnp.allclose(out, ref, atol=1e-3, rtol=1e-3), "fused/exact-GELU mismatch"

    # 3) streamed path (hidden dim split across grid axis 1, f32 accumulator).
    args = make_inputs(k2, 2, 8, 128, 256)
    out = jax.block_until_ready(mlp_block(*args, tile_h=128))
    ref = reference(*args, approximate=True)
    assert out.shape == (2, 8, 128)
    assert jnp.allclose(out, ref, atol=1e-3, rtol=1e-3), "streamed-path mismatch"

    print("KERNEL_OK")
</pallas_src>

<mosaic_0001>
module attributes {stable_mosaic.version = 11 : i64} {
  func.func @_mlp_fused_kernel(%arg0: i32, %arg1: memref<8x32xf32, #tpu.memory_space<vmem>>, %arg2: memref<1x32xf32, #tpu.memory_space<vmem>>, %arg3: memref<1x32xf32, #tpu.memory_space<vmem>>, %arg4: memref<32x64xf32, #tpu.memory_space<vmem>>, %arg5: memref<1x64xf32, #tpu.memory_space<vmem>>, %arg6: memref<64x32xf32, #tpu.memory_space<vmem>>, %arg7: memref<1x32xf32, #tpu.memory_space<vmem>>, %arg8: memref<8x32xf32, #tpu.memory_space<vmem>>) attributes {dimension_semantics = [#tpu.dimension_semantics<parallel>], iteration_bounds = array<i64: 2>, scalar_prefetch = 0 : i64, scratch_operands = 0 : i64, tpu.core_type = #tpu.core_type<tc>, window_params = [{transform_indices = @transform_0, window_bounds = array<i64: 8, 32>}, {pipeline_mode = #tpu.pipeline_mode<synchronous>, transform_indices = @transform_1, window_bounds = array<i64: 1, 32>}, {pipeline_mode = #tpu.pipeline_mode<synchronous>, transform_indices = @transform_2, window_bounds = array<i64: 1, 32>}, {pipeline_mode = #tpu.pipeline_mode<synchronous>, transform_indices = @transform_3, window_bounds = array<i64: 32, 64>}, {pipeline_mode = #tpu.pipeline_mode<synchronous>, transform_indices = @transform_4, window_bounds = array<i64: 1, 64>}, {pipeline_mode = #tpu.pipeline_mode<synchronous>, transform_indices = @transform_5, window_bounds = array<i64: 64, 32>}, {pipeline_mode = #tpu.pipeline_mode<synchronous>, transform_indices = @transform_6, window_bounds = array<i64: 1, 32>}, {transform_indices = @transform_7, window_bounds = array<i64: 8, 32>}]} {
    %c0 = arith.constant 0 : index
    %c0_0 = arith.constant 0 : index
    %0 = vector.load %arg1[%c0, %c0_0] : memref<8x32xf32, #tpu.memory_space<vmem>>, vector<8x32xf32>
    %c0_1 = arith.constant 0 : index
    %c0_2 = arith.constant 0 : index
    %1 = vector.load %arg2[%c0_1, %c0_2] : memref<1x32xf32, #tpu.memory_space<vmem>>, vector<1x32xf32>
    %c0_3 = arith.constant 0 : index
    %c0_4 = arith.constant 0 : index
    %2 = vector.load %arg3[%c0_3, %c0_4] : memref<1x32xf32, #tpu.memory_space<vmem>>, vector<1x32xf32>
    %cst = arith.constant dense<0.000000e+00> : vector<8xf32>
    %3 = vector.multi_reduction <add>, %0, %cst [1] : vector<8x32xf32> to vector<8xf32>
    %4 = vector.shape_cast %3 : vector<8xf32> to vector<8x1xf32>
    %cst_5 = arith.constant 3.200000e+01 : f32
    %5 = vector.broadcast %cst_5 : f32 to vector<8x1xf32>
    %6 = arith.divf %4, %5 : vector<8x1xf32>
    %7 = vector.broadcast %6 : vector<8x1xf32> to vector<8x32xf32>
    %8 = arith.subf %0, %7 : vector<8x32xf32>
    %9 = arith.mulf %8, %8 : vector<8x32xf32>
    %cst_6 = arith.constant dense<0.000000e+00> : vector<8xf32>
    %10 = vector.multi_reduction <add>, %9, %cst_6 [1] : vector<8x32xf32> to vector<8xf32>
    %11 = vector.shape_cast %10 : vector<8xf32> to vector<8x1xf32>
    %cst_7 = arith.constant 3.200000e+01 : f32
    %12 = vector.broadcast %cst_7 : f32 to vector<8x1xf32>
    %13 = arith.divf %11, %12 : vector<8x1xf32>
    %cst_8 = arith.constant 9.99999974E-6 : f32
    %14 = vector.broadcast %cst_8 : f32 to vector<8x1xf32>
    %15 = arith.addf %13, %14 : vector<8x1xf32>
    %16 = math.rsqrt %15 : vector<8x1xf32>
    %17 = vector.broadcast %16 : vector<8x1xf32> to vector<8x32xf32>
    %18 = arith.mulf %8, %17 : vector<8x32xf32>
    %19 = vector.broadcast %1 : vector<1x32xf32> to vector<8x32xf32>
    %20 = arith.mulf %18, %19 : vector<8x32xf32>
    %21 = vector.broadcast %2 : vector<1x32xf32> to vector<8x32xf32>
    %22 = arith.addf %20, %21 : vector<8x32xf32>
    %c0_9 = arith.constant 0 : index
    %c0_10 = arith.constant 0 : index
    %23 = vector.load %arg4[%c0_9, %c0_10] : memref<32x64xf32, #tpu.memory_space<vmem>>, vector<32x64xf32>
    %cst_11 = arith.constant dense<0.000000e+00> : vector<8x64xf32>
    %24 = tpu.matmul %22, %23, %cst_11 {dimension_numbers = #tpu.dot_dimension_numbers<[1], [0], [0], [1], [0, 0, 1, 1], [], []>} : vector<8x32xf32>, vector<32x64xf32>, vector<8x64xf32> -> vector<8x64xf32>
    %c0_12 = arith.constant 0 : index
    %c0_13 = arith.constant 0 : index
    %25 = vector.load %arg5[%c0_12, %c0_13] : memref<1x64xf32, #tpu.memory_space<vmem>>, vector<1x64xf32>
    %26 = vector.broadcast %25 : vector<1x64xf32> to vector<8x64xf32>
    %27 = arith.addf %24, %26 : vector<8x64xf32>
    %28 = arith.mulf %27, %27 : vector<8x64xf32>
    %29 = arith.mulf %27, %28 : vector<8x64xf32>
    %cst_14 = arith.constant 4.471500e-02 : f32
    %30 = vector.broadcast %cst_14 : f32 to vector<8x64xf32>
    %31 = arith.mulf %30, %29 : vector<8x64xf32>
    %32 = arith.addf %27, %31 : vector<8x64xf32>
    %cst_15 = arith.constant 0.797884583 : f32
    %33 = vector.broadcast %cst_15 : f32 to vector<8x64xf32>
    %34 = arith.mulf %33, %32 : vector<8x64xf32>
    %35 = math.tanh %34 : vector<8x64xf32>
    %cst_16 = arith.constant 1.000000e+00 : f32
    %36 = vector.broadcast %cst_16 : f32 to vector<8x64xf32>
    %37 = arith.addf %36, %35 : vector<8x64xf32>
    %cst_17 = arith.constant 5.000000e-01 : f32
    %38 = vector.broadcast %cst_17 : f32 to vector<8x64xf32>
    %39 = arith.mulf %38, %37 : vector<8x64xf32>
    %40 = arith.mulf %27, %39 : vector<8x64xf32>
    %c0_18 = arith.constant 0 : index
    %c0_19 = arith.constant 0 : index
    %41 = vector.load %arg6[%c0_18, %c0_19] : memref<64x32xf32, #tpu.memory_space<vmem>>, vector<64x32xf32>
    %cst_20 = arith.constant dense<0.000000e+00> : vector<8x32xf32>
    %42 = tpu.matmul %40, %41, %cst_20 {dimension_numbers = #tpu.dot_dimension_numbers<[1], [0], [0], [1], [0, 0, 1, 1], [], []>} : vector<8x64xf32>, vector<64x32xf32>, vector<8x32xf32> -> vector<8x32xf32>
    %c0_21 = arith.constant 0 : index
    %c0_22 = arith.constant 0 : index
    %43 = vector.load %arg7[%c0_21, %c0_22] : memref<1x32xf32, #tpu.memory_space<vmem>>, vector<1x32xf32>
    %44 = vector.broadcast %43 : vector<1x32xf32> to vector<8x32xf32>
    %45 = arith.addf %42, %44 : vector<8x32xf32>
    %c0_23 = arith.constant 0 : index
    %c0_24 = arith.constant 0 : index
    %46 = vector.load %arg8[%c0_23, %c0_24] : memref<8x32xf32, #tpu.memory_space<vmem>>, vector<8x32xf32>
    tpu.vector_store %arg8[%c0_23, %c0_24], %45 {strides = array<i32>} : memref<8x32xf32, #tpu.memory_space<vmem>>, vector<8x32xf32>,
    return
  }
  func.func @transform_0(%arg0: i32) -> (i32, i32) {
    %c0_i32 = arith.constant 0 : i32
    %c0_i32_0 = arith.constant 0 : i32
    return %arg0, %c0_i32 : i32, i32
  }
  func.func @transform_1(%arg0: i32) -> (i32, i32) {
    %c0_i32 = arith.constant 0 : i32
    %c0_i32_0 = arith.constant 0 : i32
    %c0_i32_1 = arith.constant 0 : i32
    return %c0_i32, %c0_i32_0 : i32, i32
  }
  func.func @transform_2(%arg0: i32) -> (i32, i32) {
    %c0_i32 = arith.constant 0 : i32
    %c0_i32_0 = arith.constant 0 : i32
    %c0_i32_1 = arith.constant 0 : i32
    return %c0_i32, %c0_i32_0 : i32, i32
  }
  func.func @transform_3(%arg0: i32) -> (i32, i32) {
    %c0_i32 = arith.constant 0 : i32
    %c0_i32_0 = arith.constant 0 : i32
    %c0_i32_1 = arith.constant 0 : i32
    return %c0_i32, %c0_i32_0 : i32, i32
  }
  func.func @transform_4(%arg0: i32) -> (i32, i32) {
    %c0_i32 = arith.constant 0 : i32
    %c0_i32_0 = arith.constant 0 : i32
    %c0_i32_1 = arith.constant 0 : i32
    return %c0_i32, %c0_i32_0 : i32, i32
  }
  func.func @transform_5(%arg0: i32) -> (i32, i32) {
    %c0_i32 = arith.constant 0 : i32
    %c0_i32_0 = arith.constant 0 : i32
    %c0_i32_1 = arith.constant 0 : i32
    return %c0_i32, %c0_i32_0 : i32, i32
  }
  func.func @transform_6(%arg0: i32) -> (i32, i32) {
    %c0_i32 = arith.constant 0 : i32
    %c0_i32_0 = arith.constant 0 : i32
    %c0_i32_1 = arith.constant 0 : i32
    return %c0_i32, %c0_i32_0 : i32, i32
  }
  func.func @transform_7(%arg0: i32) -> (i32, i32) {
    %c0_i32 = arith.constant 0 : i32
    %c0_i32_0 = arith.constant 0 : i32
    return %arg0, %c0_i32 : i32, i32
  }
}

</mosaic_0001>

<llo_original>
// kernel: tpu_custom_call.1
$region0: #{tpu_custom_call.1}
  #allocation0 [shape = 'u32[]', space=smem, size = 0x4, offset = 0x4, fixed_abs, tag = 'smem constant byte address 0x4 - core index']
  #allocation1 [shape = 'u32[144,128]{1,0:T(1,128)}', space=vmem, size = 0x12000, scoped, tag = 'internal scratch']
  %s0 = inlined_call_operand.vmem [shape: f32[16,32], index: 0, kind: input, shape index: {}]
  %s1 = inlined_call_operand.vmem [shape: f32[1,32], index: 1, kind: input, shape index: {}]
  %s2 = inlined_call_operand.vmem [shape: f32[1,32], index: 2, kind: input, shape index: {}]
  %s3 = inlined_call_operand.vmem [shape: f32[32,64], index: 3, kind: input, shape index: {}]
  %s4 = inlined_call_operand.vmem [shape: f32[1,64], index: 4, kind: input, shape index: {}]
  %s5 = inlined_call_operand.vmem [shape: f32[64,32], index: 5, kind: input, shape index: {}]
  %s6 = inlined_call_operand.vmem [shape: f32[1,32], index: 6, kind: input, shape index: {}]
  %s7 = inlined_call_operand.hbm [shape: f32[16,32], index: 7, kind: output, shape index: {}]
  %s8 = sld [smem:[#allocation0]]
  $region61: #{tpu_custom_call.1} parent=0
    _
  %s10 = ssub.s32 1, %s8
  %s11 = scalar_select 0, %s10, %s8
  $region1: #{tpu_custom_call.1} parent=0
    #allocation2 [shape = 'u8[8192]{0}', space=vmem, size = 0x2000, scoped, tag = 'output window, operand 0']
    #allocation3 [shape = 's32[2]{0}', space=sflag, size = 0x8, scoped, tag = 'scoped memory for tpu_custom_call.1']
    %12 = vsyncpa [#allocation3], 0
    %s13 = scalar_lea.sflag [#allocation3], 1
    %14 = vsyncpa %s13, 0
    loop: start=0, step=1, limit=4
    $region2: #{tpu_custom_call.1} parent=1 // loop_pre_header
      _
    $region3: #{tpu_custom_call.1} parent=1 // loop_header
      %s16 = sphi 0, %s20
      %p17 = scmp.ge.s32.totalorder %s16, 4
      %s26 = sphi 0, %s28
      %s29 = sphi 0, %s26
      %s30 = sphi 0, %s29
      %s46 = sphi 0, %s30
      %s50 = sphi 0, %s50
      %s52 = sphi 0, %s50
      %s53 = sphi 0, %s52
      %s67 = sphi 0, %s53
      %s71 = sphi 0, %s71
      %s73 = sphi 0, %s71
      %s74 = sphi 0, %s73
      %s88 = sphi 0, %s74
      %s92 = sphi 0, %s92
      %s94 = sphi 0, %s92
      %s95 = sphi 0, %s94
      %s109 = sphi 0, %s95
      %s113 = sphi 0, %s113
      %s115 = sphi 0, %s113
      %s116 = sphi 0, %s115
      %s130 = sphi 0, %s116
      %s134 = sphi 0, %s134
      %s136 = sphi 0, %s134
      %s137 = sphi 0, %s136
      %s151 = sphi 0, %s137
      %s155 = sphi 0, %s155
      %s157 = sphi 0, %s155
      %s158 = sphi 0, %s157
      %s172 = sphi 0, %s158
      %s178 = sphi 0, %s180
      %s181 = sphi 0, %s178
      %s182 = sphi 0, %s181
      %s198 = sphi 0, %s182
    $region4: #{tpu_custom_call.1} parent=1 // loop_header_branch
      %19 = sbr.rel (%p17) target = $region8
    $region5: #{tpu_custom_call.1} parent=1 // loop_body
      %s21 = ssub.s32 %s16, 1
      %s22 = ssub.s32 %s16, 2
      %s23 = sadd.s32 %s16, 1
      %s24 = ssub.s32 %s16, %s23
      %p25 = scmp.eq.s32.totalorder %s24, 0
      %s27 = sadd.s32 %s26, 1
      %s28 = scalar_select %p25, %s26, %s27
      %p31 = pneg %p25
      %p32 = scmp.eq.s32.totalorder %s16, 1
      %p33 = por %p31, %p32
      %p34 = scmp.ne.s32.totalorder %s26, %s29
      %p35 = scmp.eq.s32.totalorder %s16, 0
      %p36 = por %p34, %p35
      %p37 = scmp.ne.s32.totalorder %s26, %s29
      %p38 = scmp.eq.s32.totalorder %s21, 1
      %p39 = por %p37, %p38
      %p40 = scmp.ne.s32.totalorder %s29, %s30
      %p41 = scmp.eq.s32.totalorder %s21, 0
      %p42 = por %p40, %p41
      %p43 = scmp.ne.s32.totalorder %s29, %s30
      %p44 = scmp.eq.s32.totalorder %s22, 1
      %p45 = por %p43, %p44
      %p47 = scmp.ne.s32.totalorder %s30, %s46
      %p48 = scmp.eq.s32.totalorder %s22, 0
      %p49 = por %p47, %p48
      %s51 = sadd.s32 %s50, 1
      %p54 = scmp.eq.s32.totalorder %s16, 1
      %p55 = scmp.ne.s32.totalorder %s50, %s52
      %p56 = scmp.eq.s32.totalorder %s16, 0
      %p57 = por %p55, %p56
      %p58 = scmp.ne.s32.totalorder %s50, %s52
      %p59 = scmp.eq.s32.totalorder %s21, 1
      %p60 = por %p58, %p59
      %p61 = scmp.ne.s32.totalorder %s52, %s53
      %p62 = scmp.eq.s32.totalorder %s21, 0
      %p63 = por %p61, %p62
      %p64 = scmp.ne.s32.totalorder %s52, %s53
      %p65 = scmp.eq.s32.totalorder %s22, 1
      %p66 = por %p64, %p65
      %p68 = scmp.ne.s32.totalorder %s53, %s67
      %p69 = scmp.eq.s32.totalorder %s22, 0
      %p70 = por %p68, %p69
      %s72 = sadd.s32 %s71, 1
      %p75 = scmp.eq.s32.totalorder %s16, 1
      %p76 = scmp.ne.s32.totalorder %s71, %s73
      %p77 = scmp.eq.s32.totalorder %s16, 0
      %p78 = por %p76, %p77
      %p79 = scmp.ne.s32.totalorder %s71, %s73
      %p80 = scmp.eq.s32.totalorder %s21, 1
      %p81 = por %p79, %p80
      %p82 = scmp.ne.s32.totalorder %s73, %s74
      %p83 = scmp.eq.s32.totalorder %s21, 0
      %p84 = por %p82, %p83
      %p85 = scmp.ne.s32.totalorder %s73, %s74
      %p86 = scmp.eq.s32.totalorder %s22, 1
      %p87 = por %p85, %p86
      %p89 = scmp.ne.s32.totalorder %s74, %s88
      %p90 = scmp.eq.s32.totalorder %s22, 0
      %p91 = por %p89, %p90
      %s93 = sadd.s32 %s92, 1
      %p96 = scmp.eq.s32.totalorder %s16, 1
      %p97 = scmp.ne.s32.totalorder %s92, %s94
      %p98 = scmp.eq.s32.totalorder %s16, 0
      %p99 = por %p97, %p98
      %p100 = scmp.ne.s32.totalorder %s92, %s94
      %p101 = scmp.eq.s32.totalorder %s21, 1
      %p102 = por %p100, %p101
      %p103 = scmp.ne.s32.totalorder %s94, %s95
      %p104 = scmp.eq.s32.totalorder %s21, 0
      %p105 = por %p103, %p104
      %p106 = scmp.ne.s32.totalorder %s94, %s95
      %p107 = scmp.eq.s32.totalorder %s22, 1
      %p108 = por %p106, %p107
      %p110 = scmp.ne.s32.totalorder %s95, %s109
      %p111 = scmp.eq.s32.totalorder %s22, 0
      %p112 = por %p110, %p111
      %s114 = sadd.s32 %s113, 1
      %p117 = scmp.eq.s32.totalorder %s16, 1
      %p118 = scmp.ne.s32.totalorder %s113, %s115
      %p119 = scmp.eq.s32.totalorder %s16, 0
      %p120 = por %p118, %p119
      %p121 = scmp.ne.s32.totalorder %s113, %s115
      %p122 = scmp.eq.s32.totalorder %s21, 1
      %p123 = por %p121, %p122
      %p124 = scmp.ne.s32.totalorder %s115, %s116
      %p125 = scmp.eq.s32.totalorder %s21, 0
      %p126 = por %p124, %p125
      %p127 = scmp.ne.s32.totalorder %s115, %s116
      %p128 = scmp.eq.s32.totalorder %s22, 1
      %p129 = por %p127, %p128
      %p131 = scmp.ne.s32.totalorder %s116, %s130
      %p132 = scmp.eq.s32.totalorder %s22, 0
      %p133 = por %p131, %p132
      %s135 = sadd.s32 %s134, 1
      %p138 = scmp.eq.s32.totalorder %s16, 1
      %p139 = scmp.ne.s32.totalorder %s134, %s136
      %p140 = scmp.eq.s32.totalorder %s16, 0
      %p141 = por %p139, %p140
      %p142 = scmp.ne.s32.totalorder %s134, %s136
      %p143 = scmp.eq.s32.totalorder %s21, 1
      %p144 = por %p142, %p143
      %p145 = scmp.ne.s32.totalorder %s136, %s137
      %p146 = scmp.eq.s32.totalorder %s21, 0
      %p147 = por %p145, %p146
      %p148 = scmp.ne.s32.totalorder %s136, %s137
      %p149 = scmp.eq.s32.totalorder %s22, 1
      %p150 = por %p148, %p149
      %p152 = scmp.ne.s32.totalorder %s137, %s151
      %p153 = scmp.eq.s32.totalorder %s22, 0
      %p154 = por %p152, %p153
      %s156 = sadd.s32 %s155, 1
      %p159 = scmp.eq.s32.totalorder %s16, 1
      %p160 = scmp.ne.s32.totalorder %s155, %s157
      %p161 = scmp.eq.s32.totalorder %s16, 0
      %p162 = por %p160, %p161
      %p163 = scmp.ne.s32.totalorder %s155, %s157
      %p164 = scmp.eq.s32.totalorder %s21, 1
      %p165 = por %p163, %p164
      %p166 = scmp.ne.s32.totalorder %s157, %s158
      %p167 = scmp.eq.s32.totalorder %s21, 0
      %p168 = por %p166, %p167
      %p169 = scmp.ne.s32.totalorder %s157, %s158
      %p170 = scmp.eq.s32.totalorder %s22, 1
      %p171 = por %p169, %p170
      %p173 = scmp.ne.s32.totalorder %s158, %s172
      %p174 = scmp.eq.s32.totalorder %s22, 0
      %p175 = por %p173, %p174
      %s176 = ssub.s32 %s16, %s23
      %p177 = scmp.eq.s32.totalorder %s176, 0
      %s179 = sadd.s32 %s178, 1
      %s180 = scalar_select %p177, %s178, %s179
      %p183 = pneg %p177
      %p184 = scmp.eq.s32.totalorder %s16, 1
      %p185 = por %p183, %p184
      %p186 = scmp.ne.s32.totalorder %s178, %s181
      %p187 = scmp.eq.s32.totalorder %s16, 0
      %p188 = por %p186, %p187
      %p189 = scmp.ne.s32.totalorder %s178, %s181
      %p190 = scmp.eq.s32.totalorder %s21, 1
      %p191 = por %p189, %p190
      %p192 = scmp.ne.s32.totalorder %s181, %s182
      %p193 = scmp.eq.s32.totalorder %s21, 0
      %p194 = por %p192, %p193
      %p195 = scmp.ne.s32.totalorder %s181, %s182
      %p196 = scmp.eq.s32.totalorder %s22, 1
      %p197 = por %p195, %p196
      %p199 = scmp.ne.s32.totalorder %s182, %s198
      %p200 = scmp.eq.s32.totalorder %s22, 0
      %p201 = por %p199, %p200
      %p202 = scmp.le.s32.totalorder 1, %s16
      %p203 = scmp.lt.s32.totalorder %s16, 3
      %p204 = pnand %p202, %p203
      %p205 = pneg %p204
      // Predicated region
      $region9: #{tpu_custom_call.1} parent=5 // pred_check
        _
      $region10: #{tpu_custom_call.1} parent=5 // pred_check_branch
        %207 = sbr.rel (%p204) target = $region12
      $region11: #{tpu_custom_call.1} parent=5 // pred_region
        %s208 = ssub.s32 %s16, 1
        // Predicated region
        $region13: #{tpu_custom_call.1} parent=11 // pred_check
          %p209 = pneg %p63
        $region14: #{tpu_custom_call.1} parent=11 // pred_check_branch
          %211 = sbr.rel (%p209) target = $region16
        $region15: #{tpu_custom_call.1} parent=11 // pred_region
          _
        $region16: #{tpu_custom_call.1} parent=11 // pred_fallthru
          _
        // Predicated region
        $region17: #{tpu_custom_call.1} parent=11 // pred_check
          %p212 = pneg %p84
        $region18: #{tpu_custom_call.1} parent=11 // pred_check_branch
          %214 = sbr.rel (%p212) target = $region20
        $region19: #{tpu_custom_call.1} parent=11 // pred_region
          _
        $region20: #{tpu_custom_call.1} parent=11 // pred_fallthru
          _
        // Predicated region
        $region21: #{tpu_custom_call.1} parent=11 // pred_check
          %p215 = pneg %p105
        $region22: #{tpu_custom_call.1} parent=11 // pred_check_branch
          %217 = sbr.rel (%p215) target = $region24
        $region23: #{tpu_custom_call.1} parent=11 // pred_region
          _
        $region24: #{tpu_custom_call.1} parent=11 // pred_fallthru
          _
        // Predicated region
        $region25: #{tpu_custom_call.1} parent=11 // pred_check
          %p218 = pneg %p126
        $region26: #{tpu_custom_call.1} parent=11 // pred_check_branch
          %220 = sbr.rel (%p218) target = $region28
        $region27: #{tpu_custom_call.1} parent=11 // pred_region
          _
        $region28: #{tpu_custom_call.1} parent=11 // pred_fallthru
          _
        // Predicated region
        $region29: #{tpu_custom_call.1} parent=11 // pred_check
          %p221 = pneg %p147
        $region30: #{tpu_custom_call.1} parent=11 // pred_check_branch
          %223 = sbr.rel (%p221) target = $region32
        $region31: #{tpu_custom_call.1} parent=11 // pred_region
          _
        $region32: #{tpu_custom_call.1} parent=11 // pred_fallthru
          _
        // Predicated region
        $region33: #{tpu_custom_call.1} parent=11 // pred_check
          %p224 = pneg %p168
        $region34: #{tpu_custom_call.1} parent=11 // pred_check_branch
          %226 = sbr.rel (%p224) target = $region36
        $region35: #{tpu_custom_call.1} parent=11 // pred_region
          _
        $region36: #{tpu_custom_call.1} parent=11 // pred_fallthru
          _
      $region12: #{tpu_custom_call.1} parent=5 // pred_fallthru
        _
      %p227 = scmp.lt.s32.totalorder %s16, 2
      // Predicated region
      $region37: #{tpu_custom_call.1} parent=5 // pred_check
        %p228 = pneg %p227
      $region38: #{tpu_custom_call.1} parent=5 // pred_check_branch
        %230 = sbr.rel (%p228) target = $region40
      $region39: #{tpu_custom_call.1} parent=5 // pred_region
        // Predicated region
        $region41: #{tpu_custom_call.1} parent=39 // pred_check
          %p231 = pneg %p36
        $region42: #{tpu_custom_call.1} parent=39 // pred_check_branch
          %233 = sbr.rel (%p231) target = $region44
        $region43: #{tpu_custom_call.1} parent=39 // pred_region
          %p234 = scmp.lt.s32.totalorder %s16, 1
          %s235 = scalar_select %p234, %s16, 1
          %s236 = smul.addr %s235, 8
          %s237 = scalar_lea.vmem %s0, %s236
        $region44: #{tpu_custom_call.1} parent=39 // pred_fallthru
          _
      $region40: #{tpu_custom_call.1} parent=5 // pred_fallthru
        _
      %p238 = scmp.le.s32.totalorder 1, %s16
      %p239 = scmp.lt.s32.totalorder %s16, 3
      %p240 = pnand %p238, %p239
      %p241 = pneg %p240
      // Predicated region
      $region45: #{tpu_custom_call.1} parent=5 // pred_check
        _
      $region46: #{tpu_custom_call.1} parent=5 // pred_check_branch
        %243 = sbr.rel (%p240) target = $region48
      $region47: #{tpu_custom_call.1} parent=5 // pred_region
        %s244 = ssub.s32 %s16, 1
        %p245 = scmp.lt.s32.totalorder %s21, 1
        %s246 = scalar_select %p245, %s21, 1
        %s247 = smul.addr %s246, 8
        %s248 = scalar_lea.vmem %s0, %s247
        %p249 = pneg %p42
        %p250 = pneg %p39
        %p251 = pneg %p63
        %p252 = pneg %p60
        %p253 = pneg %p84
        %p254 = pneg %p81
        %p255 = pneg %p105
        %p256 = pneg %p102
        %p257 = pneg %p126
        %p258 = pneg %p123
        %p259 = pneg %p147
        %p260 = pneg %p144
        %p261 = pneg %p168
        %p262 = pneg %p165
        %p263 = pneg %p194
        %p264 = pneg %p191
        %s265 = sand.u32 %s181, 1
        %s266 = scalar_lea.sflag [#allocation3], %s265
        %s267 = sand.u32 %s181, 1
        %s268 = smul.addr %s267, 8
        %s269 = scalar_lea.vmem [#allocation2], %s268
        %p270 = scmp.lt.s32.totalorder %s21, 1
        %s271 = scalar_select %p270, %s21, 1
        %s272 = smul.addr %s271, 8
        %s273 = scalar_lea.vmem %s0, %s272
        %v274 = vld [vmem:[%s273] sm:$0xff]
        %v275 = vld [vmem:[%s1] sm:$0x1]
        %v276 = vld [vmem:[%s2] sm:$0x1]
        %vm277 = vcmask 261120
        %v278 = vsel %vm277, %v274, 0.0
        %279 = vadd.xlane.f32.xlu0 %v278
        %v280 = vpop.xlane.xlu0 %279
        %v281 = vrcp.pop 32.0
        %v282 = vmul.f32 %v280, %v281
        %v283 = vsub.f32 %v274, %v282
        %v284 = vmul.f32 %v283, %v283
        %v285 = vsel %vm277, %v284, 0.0
        %286 = vadd.xlane.f32.xlu0 %v285
        %v287 = vpop.xlane.xlu0 %286
        %v288 = vmul.f32 %v287, %v281
        %v289 = vadd.f32 %v288, 1e-05
        %v290 = vrsqrt.pop %v289
        %v291 = vmul.f32 %v283, %v290
        %v293 = vlaneseq
        %v294 = vshrl.u32 %v293, 7
        %v295 = vsub.s32 0, %v294
        %v296 = vrot.slane %v275, %v295
        %v298 = vmul.f32 %v291, %v296
        %v300 = vlaneseq
        %v301 = vshrl.u32 %v300, 7
        %v302 = vsub.s32 0, %v301
        %v303 = vrot.slane %v276, %v302
        %v305 = vadd.f32 %v298, %v303
        %v306 = vld [vmem:[%s3] sm:$0xff]
        %v307 = vld [vmem:[%s3 + $0x8] sm:$0xff]
        %v308 = vld [vmem:[%s3 + $0x10] sm:$0xff]
        %v309 = vld [vmem:[%s3 + $0x18] sm:$0xff]
        %v310 = vld [vmem:[%s4] sm:$0x1]
        %v312 = vlaneseq
        %v313 = vshrl.u32 %v312, 7
        %v314 = vsub.s32 0, %v313
        %v315 = vrot.slane %v310, %v314
        %v318 = vsel %vm277, %v305, 0
        %320 = vmatprep.subr.mxu0 0.0
        %321 = vmatpush1.msra.mxu0 0.0
        %322 = vmatprep.subr.mxu0 0.0
        %323 = vmatpush1.msra.mxu0 0.0
        %324 = vmatprep.subr.mxu0 0.0
        %325 = vmatpush1.msra.mxu0 0.0
        %326 = vmatprep.subr.mxu0 0.0
        %327 = vmatpush1.msra.mxu0 0.0
        %328 = vmatprep.subr.mxu0 0.0
        %329 = vmatpush1.msra.mxu0 0.0
        %330 = vmatprep.subr.mxu0 0.0
        %331 = vmatpush1.msra.mxu0 0.0
        %332 = vmatprep.subr.mxu0 0.0
        %333 = vmatpush1.msra.mxu0 0.0
        %334 = vmatprep.subr.mxu0 0.0
        %335 = vmatpush1.msra.mxu0 0.0
        %336 = vmatprep.subr.mxu0 0.0
        %337 = vmatpush1.msra.mxu0 0.0
        %338 = vmatprep.subr.mxu0 0.0
        %339 = vmatpush1.msra.mxu0 0.0
        %340 = vmatprep.subr.mxu0 0.0
        %341 = vmatpush1.msra.mxu0 0.0
        %342 = vmatprep.subr.mxu0 0.0
        %343 = vmatpush1.msra.mxu0 0.0
        %344 = vmatprep.subr.mxu0 0.0
        %345 = vmatpush1.msra.mxu0 %v309
        %346 = vmatprep.subr.mxu0 0.0
        %347 = vmatpush1.msra.mxu0 %v308
        %348 = vmatprep.subr.mxu0 0.0
        %349 = vmatpush1.msra.mxu0 %v307
        %350 = vmatprep.subr.mxu0 0.0
        %351 = vmatpush1.msra.mxu0 %v306
        %352 = vmatprep.subr.mxu0 0.0
        %353 = vmatpush2.msra.mxu0 0.0
        %354 = vmatprep.subr.mxu0 0.0
        %355 = vmatpush2.msra.mxu0 0.0
        %356 = vmatprep.subr.mxu0 0.0
        %357 = vmatpush2.msra.mxu0 0.0
        %358 = vmatprep.subr.mxu0 0.0
        %359 = vmatpush2.msra.mxu0 0.0
        %360 = vmatprep.subr.mxu0 0.0
        %361 = vmatpush2.msra.mxu0 0.0
        %362 = vmatprep.subr.mxu0 0.0
        %363 = vmatpush2.msra.mxu0 0.0
        %364 = vmatprep.subr.mxu0 0.0
        %365 = vmatpush2.msra.mxu0 0.0
        %366 = vmatprep.subr.mxu0 0.0
        %367 = vmatpush2.msra.mxu0 0.0
        %368 = vmatprep.subr.mxu0 0.0
        %369 = vmatpush2.msra.mxu0 0.0
        %370 = vmatprep.subr.mxu0 0.0
        %371 = vmatpush2.msra.mxu0 0.0
        %372 = vmatprep.subr.mxu0 0.0
        %373 = vmatpush2.msra.mxu0 0.0
        %374 = vmatprep.subr.mxu0 0.0
        %375 = vmatpush2.msra.mxu0 0.0
        %376 = vmatprep.subr.mxu0 0.0
        %377 = vmatpush2.msra.mxu0 0.0
        %378 = vmatprep.subr.mxu0 0.0
        %379 = vmatpush2.msra.mxu0 0.0
        %380 = vmatprep.subr.mxu0 0.0
        %381 = vmatpush2.msra.mxu0 0.0
        %382 = vmatprep.subr.mxu0 0.0
        %383 = vmatpush2.msra.mxu0 0.0
        %384 = vmatprep.mubr.f32.mxu0 0.0
        %385 = vmatmul.mubr.f32.gmra.mxu0 %v318
        %v386 = vpop.f32.mrf.mxu0
        %v387 = vadd.f32 %v315, %v386
        %v388 = vpop.f32.mrf.mxu0
        %389 = vdwg.mxu0
        %v390 = vmul.f32 %v387, %v387
        %v391 = vmul.f32 %v387, %v390
        %v392 = vmul.f32 %v391, 0.044715
        %v393 = vadd.f32 %v387, %v392
        %v394 = vmul.f32 %v393, 0.7978846
        %v395 = vtanh.pop %v394
        %v396 = vadd.f32 %v395, 1.0
        %v397 = vmul.f32 %v396, 0.5
        %v398 = vmul.f32 %v387, %v397
        %v399 = vld [vmem:[%s5] sm:$0xff]
        %v400 = vld [vmem:[%s5 + $0x8] sm:$0xff]
        %v401 = vld [vmem:[%s5 + $0x10] sm:$0xff]
        %v402 = vld [vmem:[%s5 + $0x18] sm:$0xff]
        %v403 = vld [vmem:[%s5 + $0x20] sm:$0xff]
        %v404 = vld [vmem:[%s5 + $0x28] sm:$0xff]
        %v405 = vld [vmem:[%s5 + $0x30] sm:$0xff]
        %v406 = vld [vmem:[%s5 + $0x38] sm:$0xff]
        %v407 = vld [vmem:[%s6] sm:$0x1]
        %v409 = vlaneseq
        %v410 = vshrl.u32 %v409, 7
        %v411 = vsub.s32 0, %v410
        %v412 = vrot.slane %v407, %v411
        %vm414 = vcmask 523264
        %v416 = vsel %vm414, %v398, 0
        %418 = vmatprep.subr.mxu0 0.0
        %419 = vmatpush1.msra.mxu0 0.0
        %420 = vmatprep.subr.mxu0 0.0
        %421 = vmatpush1.msra.mxu0 0.0
        %422 = vmatprep.subr.mxu0 0.0
        %423 = vmatpush1.msra.mxu0 0.0
        %424 = vmatprep.subr.mxu0 0.0
        %425 = vmatpush1.msra.mxu0 0.0
        %426 = vmatprep.subr.mxu0 0.0
        %427 = vmatpush1.msra.mxu0 0.0
        %428 = vmatprep.subr.mxu0 0.0
        %429 = vmatpush1.msra.mxu0 0.0
        %430 = vmatprep.subr.mxu0 0.0
        %431 = vmatpush1.msra.mxu0 0.0
        %432 = vmatprep.subr.mxu0 0.0
        %433 = vmatpush1.msra.mxu0 0.0
        %434 = vmatprep.subr.mxu0 0.0
        %435 = vmatpush1.msra.mxu0 %v406
        %436 = vmatprep.subr.mxu0 0.0
        %437 = vmatpush1.msra.mxu0 %v405
        %438 = vmatprep.subr.mxu0 0.0
        %439 = vmatpush1.msra.mxu0 %v404
        %440 = vmatprep.subr.mxu0 0.0
        %441 = vmatpush1.msra.mxu0 %v403
        %442 = vmatprep.subr.mxu0 0.0
        %443 = vmatpush1.msra.mxu0 %v402
        %444 = vmatprep.subr.mxu0 0.0
        %445 = vmatpush1.msra.mxu0 %v401
        %446 = vmatprep.subr.mxu0 0.0
        %447 = vmatpush1.msra.mxu0 %v400
        %448 = vmatprep.subr.mxu0 0.0
        %449 = vmatpush1.msra.mxu0 %v399
        %450 = vmatprep.subr.mxu0 0.0
        %451 = vmatpush2.msra.mxu0 0.0
        %452 = vmatprep.subr.mxu0 0.0
        %453 = vmatpush2.msra.mxu0 0.0
        %454 = vmatprep.subr.mxu0 0.0
        %455 = vmatpush2.msra.mxu0 0.0
        %456 = vmatprep.subr.mxu0 0.0
        %457 = vmatpush2.msra.mxu0 0.0
        %458 = vmatprep.subr.mxu0 0.0
        %459 = vmatpush2.msra.mxu0 0.0
        %460 = vmatprep.subr.mxu0 0.0
        %461 = vmatpush2.msra.mxu0 0.0
        %462 = vmatprep.subr.mxu0 0.0
        %463 = vmatpush2.msra.mxu0 0.0
        %464 = vmatprep.subr.mxu0 0.0
        %465 = vmatpush2.msra.mxu0 0.0
        %466 = vmatprep.subr.mxu0 0.0
        %467 = vmatpush2.msra.mxu0 0.0
        %468 = vmatprep.subr.mxu0 0.0
        %469 = vmatpush2.msra.mxu0 0.0
        %470 = vmatprep.subr.mxu0 0.0
        %471 = vmatpush2.msra.mxu0 0.0
        %472 = vmatprep.subr.mxu0 0.0
        %473 = vmatpush2.msra.mxu0 0.0
        %474 = vmatprep.subr.mxu0 0.0
        %475 = vmatpush2.msra.mxu0 0.0
        %476 = vmatprep.subr.mxu0 0.0
        %477 = vmatpush2.msra.mxu0 0.0
        %478 = vmatprep.subr.mxu0 0.0
        %479 = vmatpush2.msra.mxu0 0.0
        %480 = vmatprep.subr.mxu0 0.0
        %481 = vmatpush2.msra.mxu0 0.0
        %482 = vmatprep.mubr.f32.mxu0 0.0
        %483 = vmatmul.mubr.f32.gmra.mxu0 %v416
        %v484 = vpop.f32.mrf.mxu0
        %v485 = vadd.f32 %v412, %v484
        %v486 = vpop.f32.mrf.mxu0
        %487 = vdwg.mxu0
        %488 = vst.msk [vmem:[%s269] sm:$0xff] %vm277, %v485
        %s489 = sand.u32 %s181, 1
        %s490 = scalar_lea.sflag [#allocation3], %s489
        %s491 = sand.u32 %s181, 1
        %s492 = smul.addr %s491, 8
        %s493 = scalar_lea.vmem [#allocation2], %s492
        // Predicated region
        $region49: #{tpu_custom_call.1} parent=47 // pred_check
          %p494 = pneg %p191
        $region50: #{tpu_custom_call.1} parent=47 // pred_check_branch
          %496 = sbr.rel (%p494) target = $region52
        $region51: #{tpu_custom_call.1} parent=47 // pred_region
          %s498 = ssub.s32 128, 128
          %499 = vsyncadd %s490, %s498
          %s500 = smul.addr %s21, 128
          %s501 = scalar_lea.hbm %s7, %s500
          %s503 = sshll.u32 %s493, 4
          %s504 = int_to_ptr.vmem [resolvable:$true] %s503
          %506 = dma.vmem_to_hbm [thread:$0]  %s504, 128, %s501, %s490
        $region52: #{tpu_custom_call.1} parent=47 // pred_fallthru
          _
      $region48: #{tpu_custom_call.1} parent=5 // pred_fallthru
        _
      %p507 = scmp.le.s32.totalorder 2, %s16
      // Predicated region
      $region53: #{tpu_custom_call.1} parent=5 // pred_check
        %p508 = pneg %p507
      $region54: #{tpu_custom_call.1} parent=5 // pred_check_branch
        %510 = sbr.rel (%p508) target = $region56
      $region55: #{tpu_custom_call.1} parent=5 // pred_region
        %s511 = ssub.s32 %s16, 2
        // Predicated region
        $region57: #{tpu_custom_call.1} parent=55 // pred_check
          %p512 = pneg %p197
        $region58: #{tpu_custom_call.1} parent=55 // pred_check_branch
          %514 = sbr.rel (%p512) target = $region60
        $region59: #{tpu_custom_call.1} parent=55 // pred_region
          %s515 = sand.u32 %s182, 1
          %s516 = scalar_lea.sflag [#allocation3], %s515
          %s517 = sand.u32 %s182, 1
          %s518 = smul.addr %s517, 8
          %s519 = scalar_lea.vmem [#allocation2], %s518
          %520 = dma.done %s516, 128
        $region60: #{tpu_custom_call.1} parent=55 // pred_fallthru
          _
      $region56: #{tpu_custom_call.1} parent=5 // pred_fallthru
        _
    $region6: #{tpu_custom_call.1} parent=1 // loop_footer
      %s20 = sadd.s32 1, %s16
    $region7: #{tpu_custom_call.1} parent=1 // loop_footer_branch
      %15 = sbr.rel target = $region3
    $region8: #{tpu_custom_call.1} parent=1 // loop_exit
      _
    %521 = vsyncpa [#allocation3], 1
    %s522 = scalar_lea.sflag [#allocation3], 1
    %523 = vsyncpa %s522, 1

</llo_original>
